<compile_context>
chip_gen: v7x
topology: tpu7x:2x2x1
jax: 0.10.0
libtpu: 0.0.40
codegen_flags: <defaults>
</compile_context>

<pallas_src>
import jax
import jax.numpy as jnp
from jax.experimental import pallas as pl
from jax.experimental.pallas import tpu as pltpu


def _lnorm2d_kernel(gamma_ref, x_ref, o_ref):
    # x_ref block: (B, C, HW); gamma_ref block: (1, C, 1)
    x = x_ref[...].astype(jnp.float32)

    # Per-sample biased mean/variance over (C, HW) — matches
    # torch.var_mean(x, dim=(1,2,3), unbiased=False).
    mean = jnp.mean(x, axis=(1, 2), keepdims=True)          # (B, 1, 1)
    centered = x - mean                                      # reused below
    var = jnp.mean(centered * centered, axis=(1, 2), keepdims=True)

    inv_std = jax.lax.rsqrt(var + 1e-5)                      # EUP, per sample
    g = gamma_ref[...].astype(jnp.float32)                   # (1, C, 1)
    scale = g * inv_std                                      # (B, C, 1)

    o_ref[...] = (centered * scale).astype(o_ref.dtype)


def _pick_samples_per_block(n, bytes_per_sample, target_bytes=1 << 20):
    """Largest divisor of n with block <= ~target_bytes and >=2 grid steps."""
    cap = max(1, target_bytes // max(bytes_per_sample, 1))
    if n >= 2:
        cap = min(cap, n // 2)   # keep >=2 parallel steps (v7x: 2 TensorCores)
    cap = max(1, min(cap, n))
    for b in range(cap, 0, -1):
        if n % b == 0:
            return b
    return 1


def lnorm2d(x, gamma):
    """x: (N, C, H, W); gamma: (1, C, 1, 1). Returns (N, C, H, W)."""
    N, C, H, W = x.shape
    HW = H * W

    # Lane-dense layouts (layout plumbing only — free reshapes in the wrapper).
    x2 = x.reshape(N, C, HW)
    g2 = gamma.reshape(1, C, 1)

    itemsize = jnp.dtype(x.dtype).itemsize
    bytes_per_sample = C * HW * itemsize
    B = _pick_samples_per_block(N, bytes_per_sample)
    grid = (N // B,)

    # VMEM budget: in + out blocks, each double-buffered, plus gamma + slack.
    block_bytes = B * C * HW * itemsize
    needed = 4 * block_bytes + C * itemsize + (1 << 20)
    vmem_limit = int(min(max(needed, 16 << 20), 64 << 20))
    # TODO(synk): if 4*block_bytes exceeds ~64 MiB (v7x physical VMEM), switch
    # to a second 'arbitrary' grid axis over H*W tiles with sum/sumsq scratch
    # accumulators and a pl.when finalize pass.

    out = pl.pallas_call(
        _lnorm2d_kernel,
        out_shape=jax.ShapeDtypeStruct((N, C, HW), x.dtype),
        grid_spec=pltpu.PrefetchScalarGridSpec(
            num_scalar_prefetch=0,
            grid=grid,
            in_specs=[
                pl.BlockSpec((1, C, 1), lambda b: (0, 0, 0)),    # gamma (resident)
                pl.BlockSpec((B, C, HW), lambda b: (b, 0, 0)),   # x
            ],
            out_specs=pl.BlockSpec((B, C, HW), lambda b: (b, 0, 0)),
        ),
        compiler_params=pltpu.CompilerParams(
            dimension_semantics=("parallel",),
            vmem_limit_bytes=vmem_limit,
        ),
    )(g2, x2)

    return out.reshape(N, C, H, W)


if __name__ == "__main__":
    key = jax.random.PRNGKey(0)
    N, C, H, W = 2, 4, 16, 16

    x = jax.random.normal(key, (N, C, H, W), dtype=jnp.float32)
    # nn.Parameter(torch.ones(1, emb, 1, 1)) -> deterministic ones init
    gamma = jnp.ones((1, C, 1, 1), dtype=jnp.float32)

    out = lnorm2d(x, gamma)
    out = jax.block_until_ready(out)

    # Pure-JAX reference check of the same semantics.
    mean = jnp.mean(x, axis=(1, 2, 3), keepdims=True)
    var = jnp.mean((x - mean) ** 2, axis=(1, 2, 3), keepdims=True)
    ref = gamma * ((x - mean) / jnp.sqrt(var + 1e-5))
    assert jnp.allclose(out, ref, atol=1e-5, rtol=1e-5), "mismatch vs reference"

    print("KERNEL_OK")
</pallas_src>

<mosaic_0001>
module attributes {stable_mosaic.version = 11 : i64} {
  func.func @_lnorm2d_kernel(%arg0: i32, %arg1: memref<1x4x1xf32, #tpu.memory_space<vmem>>, %arg2: memref<1x4x256xf32, #tpu.memory_space<vmem>>, %arg3: memref<1x4x256xf32, #tpu.memory_space<vmem>>) attributes {dimension_semantics = [#tpu.dimension_semantics<parallel>], iteration_bounds = array<i64: 2>, scalar_prefetch = 0 : i64, scratch_operands = 0 : i64, tpu.core_type = #tpu.core_type<tc>, window_params = [{pipeline_mode = #tpu.pipeline_mode<synchronous>, transform_indices = @transform_0, window_bounds = array<i64: 1, 4, 1>}, {transform_indices = @transform_1, window_bounds = array<i64: 1, 4, 256>}, {transform_indices = @transform_2, window_bounds = array<i64: 1, 4, 256>}]} {
    %c0 = arith.constant 0 : index
    %c0_0 = arith.constant 0 : index
    %c0_1 = arith.constant 0 : index
    %0 = vector.load %arg2[%c0, %c0_0, %c0_1] : memref<1x4x256xf32, #tpu.memory_space<vmem>>, vector<1x4x256xf32>
    %cst = arith.constant dense<0.000000e+00> : vector<1xf32>
    %1 = vector.multi_reduction <add>, %0, %cst [1, 2] : vector<1x4x256xf32> to vector<1xf32>
    %2 = vector.shape_cast %1 : vector<1xf32> to vector<1x1x1xf32>
    %cst_2 = arith.constant 1.024000e+03 : f32
    %3 = vector.broadcast %cst_2 : f32 to vector<1x1x1xf32>
    %4 = arith.divf %2, %3 : vector<1x1x1xf32>
    %5 = vector.broadcast %4 : vector<1x1x1xf32> to vector<1x4x256xf32>
    %6 = arith.subf %0, %5 : vector<1x4x256xf32>
    %7 = arith.mulf %6, %6 : vector<1x4x256xf32>
    %cst_3 = arith.constant dense<0.000000e+00> : vector<1xf32>
    %8 = vector.multi_reduction <add>, %7, %cst_3 [1, 2] : vector<1x4x256xf32> to vector<1xf32>
    %9 = vector.shape_cast %8 : vector<1xf32> to vector<1x1x1xf32>
    %cst_4 = arith.constant 1.024000e+03 : f32
    %10 = vector.broadcast %cst_4 : f32 to vector<1x1x1xf32>
    %11 = arith.divf %9, %10 : vector<1x1x1xf32>
    %cst_5 = arith.constant 9.99999974E-6 : f32
    %12 = vector.broadcast %cst_5 : f32 to vector<1x1x1xf32>
    %13 = arith.addf %11, %12 : vector<1x1x1xf32>
    %14 = math.rsqrt %13 : vector<1x1x1xf32>
    %c0_6 = arith.constant 0 : index
    %c0_7 = arith.constant 0 : index
    %c0_8 = arith.constant 0 : index
    %15 = vector.load %arg1[%c0_6, %c0_7, %c0_8] : memref<1x4x1xf32, #tpu.memory_space<vmem>>, vector<1x4x1xf32>
    %16 = vector.broadcast %14 : vector<1x1x1xf32> to vector<1x4x1xf32>
    %17 = arith.mulf %15, %16 : vector<1x4x1xf32>
    %18 = vector.broadcast %17 : vector<1x4x1xf32> to vector<1x4x256xf32>
    %19 = arith.mulf %6, %18 : vector<1x4x256xf32>
    %c0_9 = arith.constant 0 : index
    %c0_10 = arith.constant 0 : index
    %c0_11 = arith.constant 0 : index
    %20 = vector.load %arg3[%c0_9, %c0_10, %c0_11] : memref<1x4x256xf32, #tpu.memory_space<vmem>>, vector<1x4x256xf32>
    tpu.vector_store %arg3[%c0_9, %c0_10, %c0_11], %19 {strides = array<i32>} : memref<1x4x256xf32, #tpu.memory_space<vmem>>, vector<1x4x256xf32>,
    return
  }
  func.func @transform_0(%arg0: i32) -> (i32, i32, i32) {
    %c0_i32 = arith.constant 0 : i32
    %c0_i32_0 = arith.constant 0 : i32
    %c0_i32_1 = arith.constant 0 : i32
    %c0_i32_2 = arith.constant 0 : i32
    return %c0_i32, %c0_i32_0, %c0_i32_1 : i32, i32, i32
  }
  func.func @transform_1(%arg0: i32) -> (i32, i32, i32) {
    %c0_i32 = arith.constant 0 : i32
    %c0_i32_0 = arith.constant 0 : i32
    %c0_i32_1 = arith.constant 0 : i32
    return %arg0, %c0_i32, %c0_i32_0 : i32, i32, i32
  }
  func.func @transform_2(%arg0: i32) -> (i32, i32, i32) {
    %c0_i32 = arith.constant 0 : i32
    %c0_i32_0 = arith.constant 0 : i32
    %c0_i32_1 = arith.constant 0 : i32
    return %arg0, %c0_i32, %c0_i32_0 : i32, i32, i32
  }
}

</mosaic_0001>

<llo_original>
// kernel: tpu_custom_call.1
$region0: #{tpu_custom_call.1}
  #allocation0 [shape = 'u32[]', space=smem, size = 0x4, offset = 0x4, fixed_abs, tag = 'smem constant byte address 0x4 - core index']
  #allocation1 [shape = 'u32[144,128]{1,0:T(1,128)}', space=vmem, size = 0x12000, scoped, tag = 'internal scratch']
  %s0 = inlined_call_operand.vmem [shape: f32[1,4,1], index: 0, kind: input, shape index: {}]
  %s1 = inlined_call_operand.hbm [shape: f32[2,4,256], index: 1, kind: input, shape index: {}]
  %s2 = inlined_call_operand.hbm [shape: f32[2,4,256], index: 2, kind: output, shape index: {}]
  %s3 = sld [smem:[#allocation0]]
  $region45: #{tpu_custom_call.1} parent=0
    _
  %s5 = ssub.s32 1, %s3
  %s6 = scalar_select 0, %s5, %s3
  $region1: #{tpu_custom_call.1} parent=0
    #allocation2 [shape = 'u8[8192]{0}', space=vmem, size = 0x2000, scoped, tag = 'input window, operand 1']
    #allocation3 [shape = 's32[2]{0}', space=sflag, size = 0x8, scoped, tag = 'scoped memory for tpu_custom_call.1']
    #allocation4 [shape = 's32[2]{0}', space=sflag, size = 0x8, scoped, tag = 'scoped memory for tpu_custom_call.1']
    #allocation5 [shape = 'u8[8192]{0}', space=vmem, size = 0x2000, scoped, tag = 'output window, operand 0']
    %7 = vsyncpa [#allocation3], 0
    %s8 = scalar_lea.sflag [#allocation3], 1
    %9 = vsyncpa %s8, 0
    %10 = vsyncpa [#allocation4], 0
    %s11 = scalar_lea.sflag [#allocation4], 1
    %12 = vsyncpa %s11, 0
    loop: start=0, step=1, limit=4
    $region2: #{tpu_custom_call.1} parent=1 // loop_pre_header
      _
    $region3: #{tpu_custom_call.1} parent=1 // loop_header
      %s14 = sphi 0, %s18
      %p15 = scmp.ge.s32.totalorder %s14, 4
      %s22 = sphi 0, %s22
      %s24 = sphi 0, %s22
      %s25 = sphi 0, %s24
      %s39 = sphi 0, %s25
      %s45 = sphi 0, %s47
      %s48 = sphi 0, %s45
      %s49 = sphi 0, %s48
      %s65 = sphi 0, %s49
      %s71 = sphi 0, %s73
      %s74 = sphi 0, %s71
      %s75 = sphi 0, %s74
      %s91 = sphi 0, %s75
    $region4: #{tpu_custom_call.1} parent=1 // loop_header_branch
      %17 = sbr.rel (%p15) target = $region8
    $region5: #{tpu_custom_call.1} parent=1 // loop_body
      %s19 = ssub.s32 %s14, 1
      %s20 = ssub.s32 %s14, 2
      %s21 = sadd.s32 %s14, 1
      %s23 = sadd.s32 %s22, 1
      %p26 = scmp.eq.s32.totalorder %s14, 1
      %p27 = scmp.ne.s32.totalorder %s22, %s24
      %p28 = scmp.eq.s32.totalorder %s14, 0
      %p29 = por %p27, %p28
      %p30 = scmp.ne.s32.totalorder %s22, %s24
      %p31 = scmp.eq.s32.totalorder %s19, 1
      %p32 = por %p30, %p31
      %p33 = scmp.ne.s32.totalorder %s24, %s25
      %p34 = scmp.eq.s32.totalorder %s19, 0
      %p35 = por %p33, %p34
      %p36 = scmp.ne.s32.totalorder %s24, %s25
      %p37 = scmp.eq.s32.totalorder %s20, 1
      %p38 = por %p36, %p37
      %p40 = scmp.ne.s32.totalorder %s25, %s39
      %p41 = scmp.eq.s32.totalorder %s20, 0
      %p42 = por %p40, %p41
      %s43 = ssub.s32 %s14, %s21
      %p44 = scmp.eq.s32.totalorder %s43, 0
      %s46 = sadd.s32 %s45, 1
      %s47 = scalar_select %p44, %s45, %s46
      %p50 = pneg %p44
      %p51 = scmp.eq.s32.totalorder %s14, 1
      %p52 = por %p50, %p51
      %p53 = scmp.ne.s32.totalorder %s45, %s48
      %p54 = scmp.eq.s32.totalorder %s14, 0
      %p55 = por %p53, %p54
      %p56 = scmp.ne.s32.totalorder %s45, %s48
      %p57 = scmp.eq.s32.totalorder %s19, 1
      %p58 = por %p56, %p57
      %p59 = scmp.ne.s32.totalorder %s48, %s49
      %p60 = scmp.eq.s32.totalorder %s19, 0
      %p61 = por %p59, %p60
      %p62 = scmp.ne.s32.totalorder %s48, %s49
      %p63 = scmp.eq.s32.totalorder %s20, 1
      %p64 = por %p62, %p63
      %p66 = scmp.ne.s32.totalorder %s49, %s65
      %p67 = scmp.eq.s32.totalorder %s20, 0
      %p68 = por %p66, %p67
      %s69 = ssub.s32 %s14, %s21
      %p70 = scmp.eq.s32.totalorder %s69, 0
      %s72 = sadd.s32 %s71, 1
      %s73 = scalar_select %p70, %s71, %s72
      %p76 = pneg %p70
      %p77 = scmp.eq.s32.totalorder %s14, 1
      %p78 = por %p76, %p77
      %p79 = scmp.ne.s32.totalorder %s71, %s74
      %p80 = scmp.eq.s32.totalorder %s14, 0
      %p81 = por %p79, %p80
      %p82 = scmp.ne.s32.totalorder %s71, %s74
      %p83 = scmp.eq.s32.totalorder %s19, 1
      %p84 = por %p82, %p83
      %p85 = scmp.ne.s32.totalorder %s74, %s75
      %p86 = scmp.eq.s32.totalorder %s19, 0
      %p87 = por %p85, %p86
      %p88 = scmp.ne.s32.totalorder %s74, %s75
      %p89 = scmp.eq.s32.totalorder %s20, 1
      %p90 = por %p88, %p89
      %p92 = scmp.ne.s32.totalorder %s75, %s91
      %p93 = scmp.eq.s32.totalorder %s20, 0
      %p94 = por %p92, %p93
      %p95 = scmp.le.s32.totalorder 1, %s14
      %p96 = scmp.lt.s32.totalorder %s14, 3
      %p97 = pnand %p95, %p96
      %p98 = pneg %p97
      // Predicated region
      $region9: #{tpu_custom_call.1} parent=5 // pred_check
        _
      $region10: #{tpu_custom_call.1} parent=5 // pred_check_branch
        %100 = sbr.rel (%p97) target = $region12
      $region11: #{tpu_custom_call.1} parent=5 // pred_region
        %s101 = ssub.s32 %s14, 1
        // Predicated region
        $region13: #{tpu_custom_call.1} parent=11 // pred_check
          %p102 = pneg %p35
        $region14: #{tpu_custom_call.1} parent=11 // pred_check_branch
          %104 = sbr.rel (%p102) target = $region16
        $region15: #{tpu_custom_call.1} parent=11 // pred_region
          _
        $region16: #{tpu_custom_call.1} parent=11 // pred_fallthru
          _
      $region12: #{tpu_custom_call.1} parent=5 // pred_fallthru
        _
      %p105 = scmp.lt.s32.totalorder %s14, 2
      // Predicated region
      $region17: #{tpu_custom_call.1} parent=5 // pred_check
        %p106 = pneg %p105
      $region18: #{tpu_custom_call.1} parent=5 // pred_check_branch
        %108 = sbr.rel (%p106) target = $region20
      $region19: #{tpu_custom_call.1} parent=5 // pred_region
        // Predicated region
        $region21: #{tpu_custom_call.1} parent=19 // pred_check
          %p109 = pneg %p55
        $region22: #{tpu_custom_call.1} parent=19 // pred_check_branch
          %111 = sbr.rel (%p109) target = $region24
        $region23: #{tpu_custom_call.1} parent=19 // pred_region
          %s112 = sand.u32 %s45, 1
          %s113 = scalar_lea.sflag [#allocation3], %s112
          %s114 = sand.u32 %s45, 1
          %s115 = smul.addr %s114, 8
          %s116 = scalar_lea.vmem [#allocation2], %s115
          %s118 = ssub.s32 128, 128
          %119 = vsyncadd %s113, %s118
          %s120 = smul.addr %s14, 2
          %s121 = smul.addr %s120, 64
          %s122 = scalar_lea.hbm %s1, %s121
          %s124 = sshll.u32 %s116, 4
          %s125 = int_to_ptr.vmem [resolvable:$true] %s124
          %127 = dma.hbm_to_vmem [thread:$0]  %s122, 128, %s125, %s113
        $region24: #{tpu_custom_call.1} parent=19 // pred_fallthru
          _
      $region20: #{tpu_custom_call.1} parent=5 // pred_fallthru
        _
      %p128 = scmp.le.s32.totalorder 1, %s14
      %p129 = scmp.lt.s32.totalorder %s14, 3
      %p130 = pnand %p128, %p129
      %p131 = pneg %p130
      // Predicated region
      $region25: #{tpu_custom_call.1} parent=5 // pred_check
        _
      $region26: #{tpu_custom_call.1} parent=5 // pred_check_branch
        %133 = sbr.rel (%p130) target = $region28
      $region27: #{tpu_custom_call.1} parent=5 // pred_region
        %s134 = ssub.s32 %s14, 1
        %s135 = sand.u32 %s48, 1
        %s136 = scalar_lea.sflag [#allocation3], %s135
        %s137 = sand.u32 %s48, 1
        %s138 = smul.addr %s137, 8
        %s139 = scalar_lea.vmem [#allocation2], %s138
        // Predicated region
        $region29: #{tpu_custom_call.1} parent=27 // pred_check
          %p140 = pneg %p61
        $region30: #{tpu_custom_call.1} parent=27 // pred_check_branch
          %142 = sbr.rel (%p140) target = $region32
        $region31: #{tpu_custom_call.1} parent=27 // pred_region
          %143 = dma.done %s136, 128
        $region32: #{tpu_custom_call.1} parent=27 // pred_fallthru
          _
        %p144 = pneg %p35
        %p145 = pneg %p32
        %s146 = sand.u32 %s48, 1
        %s147 = scalar_lea.sflag [#allocation3], %s146
        %s148 = sand.u32 %s48, 1
        %s149 = smul.addr %s148, 8
        %s150 = scalar_lea.vmem [#allocation2], %s149
        %p151 = pneg %p61
        %p152 = pneg %p58
        %p153 = pneg %p87
        %p154 = pneg %p84
        %s155 = sand.u32 %s74, 1
        %s156 = scalar_lea.sflag [#allocation4], %s155
        %s157 = sand.u32 %s74, 1
        %s158 = smul.addr %s157, 8
        %s159 = scalar_lea.vmem [#allocation5], %s158
        %v160 = vld [vmem:[%s139] sm:$0xff]
        %v162 = vcombine.high %v160, %v160
        %vm164 = vcmask 1043456
        %v165 = vsel %vm164, %v160, 0.0
        %v166 = vsel %vm164, %v162, 0.0
        %v167 = vadd.f32 %v165, %v166
        %168 = vadd.xlane.f32.xlu0 %v167
        %v169 = vpop.xlane.xlu0 %168
        %v170 = vrot.slane %v169, 4
        %v171 = vadd.f32 %v169, %v170
        %v172 = vrot.slane %v171, 2
        %v173 = vadd.f32 %v171, %v172
        %v174 = vrot.slane %v173, 1
        %v175 = vadd.f32 %v173, %v174
        %v176 = vrcp.pop 1024.0
        %v177 = vmul.f32 %v175, %v176
        %v178 = vsub.f32 %v160, %v177
        %v179 = vmul.f32 %v178, %v178
        %v181 = vcombine.high %v179, %v179
        %v183 = vsel %vm164, %v179, 0.0
        %v184 = vsel %vm164, %v181, 0.0
        %v185 = vadd.f32 %v183, %v184
        %186 = vadd.xlane.f32.xlu0 %v185
        %v187 = vpop.xlane.xlu0 %186
        %v188 = vrot.slane %v187, 4
        %v189 = vadd.f32 %v187, %v188
        %v190 = vrot.slane %v189, 2
        %v191 = vadd.f32 %v189, %v190
        %v192 = vrot.slane %v191, 1
        %v193 = vadd.f32 %v191, %v192
        %v194 = vmul.f32 %v193, %v176
        %v195 = vadd.f32 %v194, 1e-05
        %v196 = vrsqrt.pop %v195
        %v197 = vld [vmem:[%s0] sm:$0xf]
        %v198 = vmul.f32 %v197, %v196
        %200 = vset.pattern.permute.xlu0 0
        %201 = vperm.xlu0 %200, %v198
        %v202 = vpop.permute.xlu0 %201
        %v204 = vunpack.c.l.s4 839922192
        %v205 = vunpack.c.0.s8 %v204
        %v206 = vlaneseq
        %v207 = vshrl.u32 %v206, 7
        %v208 = vsub.s32 %v205, %v207
        %v209 = vrot.slane %v202, %v208
        %v211 = vmul.f32 %v178, %v209
        %212 = vst [vmem:[%s159] sm:$0xff] %v211
        %s213 = sand.u32 %s74, 1
        %s214 = scalar_lea.sflag [#allocation4], %s213
        %s215 = sand.u32 %s74, 1
        %s216 = smul.addr %s215, 8
        %s217 = scalar_lea.vmem [#allocation5], %s216
        // Predicated region
        $region33: #{tpu_custom_call.1} parent=27 // pred_check
          %p218 = pneg %p84
        $region34: #{tpu_custom_call.1} parent=27 // pred_check_branch
          %220 = sbr.rel (%p218) target = $region36
        $region35: #{tpu_custom_call.1} parent=27 // pred_region
          %s222 = ssub.s32 128, 128
          %223 = vsyncadd %s214, %s222
          %s224 = smul.addr %s19, 2
          %s225 = smul.addr %s224, 64
          %s226 = scalar_lea.hbm %s2, %s225
          %s228 = sshll.u32 %s217, 4
          %s229 = int_to_ptr.vmem [resolvable:$true] %s228
          %231 = dma.vmem_to_hbm [thread:$0]  %s229, 128, %s226, %s214
        $region36: #{tpu_custom_call.1} parent=27 // pred_fallthru
          _
      $region28: #{tpu_custom_call.1} parent=5 // pred_fallthru
        _
      %p232 = scmp.le.s32.totalorder 2, %s14
      // Predicated region
      $region37: #{tpu_custom_call.1} parent=5 // pred_check
        %p233 = pneg %p232
      $region38: #{tpu_custom_call.1} parent=5 // pred_check_branch
        %235 = sbr.rel (%p233) target = $region40
      $region39: #{tpu_custom_call.1} parent=5 // pred_region
        %s236 = ssub.s32 %s14, 2
        // Predicated region
        $region41: #{tpu_custom_call.1} parent=39 // pred_check
          %p237 = pneg %p90
        $region42: #{tpu_custom_call.1} parent=39 // pred_check_branch
          %239 = sbr.rel (%p237) target = $region44
        $region43: #{tpu_custom_call.1} parent=39 // pred_region
          %s240 = sand.u32 %s75, 1
          %s241 = scalar_lea.sflag [#allocation4], %s240
          %s242 = sand.u32 %s75, 1
          %s243 = smul.addr %s242, 8
          %s244 = scalar_lea.vmem [#allocation5], %s243
          %245 = dma.done %s241, 128
        $region44: #{tpu_custom_call.1} parent=39 // pred_fallthru
          _
      $region40: #{tpu_custom_call.1} parent=5 // pred_fallthru
        _
    $region6: #{tpu_custom_call.1} parent=1 // loop_footer
      %s18 = sadd.s32 1, %s14
    $region7: #{tpu_custom_call.1} parent=1 // loop_footer_branch
      %13 = sbr.rel target = $region3
    $region8: #{tpu_custom_call.1} parent=1 // loop_exit
      _
    %246 = vsyncpa [#allocation3], 1
    %s247 = scalar_lea.sflag [#allocation3], 1
    %248 = vsyncpa %s247, 1
    %249 = vsyncpa [#allocation4], 1
    %s250 = scalar_lea.sflag [#allocation4], 1
    %251 = vsyncpa %s250, 1

</llo_original>
